<compile_context>
chip_gen: v7x
topology: tpu7x:2x2x1
jax: 0.10.0
libtpu: 0.0.40
codegen_flags: <defaults>
</compile_context>

<pallas_src>
import functools

import jax
import jax.numpy as jnp
from jax.experimental import pallas as pl
from jax.experimental.pallas import tpu as pltpu


def _round_up(v, m):
    return ((v + m - 1) // m) * m


def _pad2(a, rows, cols):
    return jnp.pad(a, ((0, rows - a.shape[0]), (0, cols - a.shape[1])))


def _abmil_kernel(n_total, tile_n, tiles_per_shard, needs_mask,
                  x_ref, w1_ref, b1_ref, wa1_ref, ba1_ref, wa2_ref, ba2_ref,
                  m_out, l_out, z_out,
                  m_sc, l_sc, z_sc):
    s = pl.program_id(0)          # shard (parallel; one per TensorCore on v7x)
    i = pl.program_id(1)          # tile inside the shard (sequential reduction)

    # ---- init the online-softmax state on the first tile of each shard ----
    @pl.when(i == 0)
    def _init():
        m_sc[...] = jnp.full_like(m_sc, -jnp.inf)
        l_sc[...] = jnp.zeros_like(l_sc)
        z_sc[...] = jnp.zeros_like(z_sc)

    cd = w1_ref.dtype                       # MXU compute dtype (bf16 or f32)
    x = x_ref[...].astype(cd)               # per-tile cast; x stays f32 in HBM

    # ---- embedding: Linear + ReLU (MXU dot, f32 accumulate) ----
    h = jnp.dot(x, w1_ref[...], preferred_element_type=jnp.float32)   # (T, Hp)
    h = jnp.maximum(h + b1_ref[...], 0.0)

    if needs_mask:
        # Global row ids of this (logical) tile; rows >= N are padding and are
        # forced to zero so OOB garbage (possibly NaN) can never poison the
        # pooled accumulator via 0 * NaN.
        t_idx = s * tiles_per_shard + i
        row_ids = t_idx * tile_n + jax.lax.broadcasted_iota(
            jnp.int32, (tile_n, 1), 0)
        valid = row_ids < n_total                                     # (T, 1)
        h = jnp.where(valid, h, 0.0)

    h_c = h.astype(cd)

    # ---- attention score: Linear -> tanh -> (1, Hp) row dot ----
    t = jnp.dot(h_c, wa1_ref[...], preferred_element_type=jnp.float32)
    t = jnp.tanh(t + ba1_ref[...])                                    # (T, Hp)
    # H -> 1 projection on VPU (mul) + XLU (lane reduce); avoids a padded
    # lane-width-1 MXU matmul.
    a = jnp.sum(t * wa2_ref[...], axis=-1, keepdims=True) + ba2_ref[...]

    if needs_mask:
        a = jnp.where(valid, a, -1e30)

    # ---- online softmax update over the instance axis ----
    m_prev = m_sc[...]                                                # (1, 1)
    m_new = jnp.maximum(m_prev, jnp.max(a, axis=0, keepdims=True))
    alpha = jnp.exp(m_prev - m_new)                                   # rescale old
    p = jnp.exp(a - m_new)                                            # (T, 1)
    if needs_mask:
        p = jnp.where(valid, p, 0.0)

    l_sc[...] = alpha * l_sc[...] + jnp.sum(p, axis=0, keepdims=True)
    # Attention-weighted pooling as an MXU contraction over the instance axis:
    # (T, 1) x (T, Hp) contracting dim 0 -> (1, Hp).
    z_sc[...] = alpha * z_sc[...] + jax.lax.dot_general(
        p.astype(cd), h_c,
        dimension_numbers=(((0,), (0,)), ((), ())),
        preferred_element_type=jnp.float32)
    m_sc[...] = m_new

    # ---- emit this shard's partial (m, l, z) on its last tile ----
    @pl.when(i == pl.num_programs(1) - 1)
    def _finalize():
        m_out[0] = m_sc[...]
        l_out[0] = l_sc[...]
        z_out[0] = z_sc[...]


def abmil_forward(x, params, *, tile_n=None, num_shards=None,
                  compute_dtype=jnp.bfloat16):
    """ABMIL forward. x: (N, input_dim) float32 bag -> (num_classes,) float32.

    compute_dtype: dtype of MXU operands (weights + per-tile x cast); bf16 by
      default (native MXU dtype on every TPU generation, f32 accumulation).
    tile_n: instance-axis tile (default 1024; multiple of 8 for f32, 16 for bf16).
    num_shards: leading "parallel" grid axis; 2 feeds both v7x TensorCores.
    """
    w1, b1, wa1, ba1, wa2, ba2, wc, bc = params
    n, d = x.shape
    assert n >= 1, "bag must contain at least one instance"
    h_dim = w1.shape[1]
    hp = _round_up(h_dim, 128)          # lane-align the hidden dim
    # NOTE: for best MXU utilisation input_dim should itself be a multiple of
    # 128; x is not padded here because that would cost an extra HBM pass.

    cd = jnp.dtype(compute_dtype)
    align = max(8, 32 // min(cd.itemsize, x.dtype.itemsize))   # f32:8, bf16:16
    if tile_n is None:
        tile_n = min(1024, max(align, _round_up(n, align)))
    assert tile_n % align == 0, (
        f"tile_n={tile_n} must be a multiple of {align} for "
        f"compute_dtype={cd.name} / x dtype={x.dtype}")

    num_tiles = pl.cdiv(n, tile_n)
    if num_shards is None:
        # 2 shards -> both v7x TensorCores. On single-core parts the only cost
        # is at most one duplicated, fully-masked tile, so only shard when the
        # split is even or the bag is large enough to amortise it.
        num_shards = 2 if (num_tiles % 2 == 0 or num_tiles >= 8) else 1
    num_shards = max(1, min(num_shards, num_tiles))
    tiles_per_shard = pl.cdiv(num_tiles, num_shards)
    has_dup_tiles = num_shards * tiles_per_shard != num_tiles
    needs_mask = (n % tile_n != 0) or has_dup_tiles

    # ---- one-time weight prep (cheap vs. the x stream) ----
    w1p = _pad2(w1, d, hp).astype(cd)                     # (D, Hp)   MXU
    wa1p = _pad2(wa1, hp, hp).astype(cd)                  # (Hp, Hp)  MXU
    b1p = _pad2(b1, 1, hp).astype(jnp.float32)            # (1, Hp)
    ba1p = _pad2(ba1, 1, hp).astype(jnp.float32)          # (1, Hp)
    wa2row = _pad2(wa2.T, 1, hp).astype(jnp.float32)      # (1, Hp)   VPU row
    ba2r = ba2.astype(jnp.float32).reshape(1, 1)          # (1, 1)

    const = lambda s, i: (0, 0)
    if has_dup_tiles:
        x_map = lambda s, i: (jnp.minimum(s * tiles_per_shard + i,
                                          num_tiles - 1), 0)
    else:
        x_map = lambda s, i: (s * tiles_per_shard + i, 0)
    out_map = lambda s, i: (s, 0, 0)

    def _const_spec(shape):
        # Resident weights don't need double buffering; halving their VMEM
        # footprint matters on v7x's 64 MiB VMEM. Fall back silently if this
        # jax version has no pipeline_mode kwarg.
        try:
            return pl.BlockSpec(shape, const, pipeline_mode=pl.Buffered(1))
        except (TypeError, AttributeError):
            return pl.BlockSpec(shape, const)

    # ---- VMEM budget / cost estimate derived from the actual shapes ----
    w_bytes = (w1p.size * w1p.dtype.itemsize + wa1p.size * wa1p.dtype.itemsize
               + (b1p.size + ba1p.size + wa2row.size + ba2r.size) * 4)
    x_tile_bytes = tile_n * d * x.dtype.itemsize
    out_bytes = num_shards * (hp + 2) * 4
    vmem_needed = (2 * x_tile_bytes          # double-buffered x stream
                   + 2 * w_bytes             # weights (conservative: 2x)
                   + (hp + 2) * 4            # scratch m / l / z
                   + 2 * (hp + 2) * 4)       # output blocks
    vmem_limit = int(min(max(vmem_needed + (4 << 20), 32 << 20), 120 << 20))

    cost = pl.CostEstimate(
        flops=int(2 * n * (d * hp + hp * hp + 2 * hp)),
        transcendentals=int(n * hp + 2 * n),
        bytes_accessed=int(n * d * x.dtype.itemsize + w_bytes + out_bytes))

    kernel = functools.partial(_abmil_kernel, n, tile_n, tiles_per_shard,
                               needs_mask)

    grid_spec = pltpu.PrefetchScalarGridSpec(
        num_scalar_prefetch=0,
        grid=(num_shards, tiles_per_shard),
        in_specs=[
            pl.BlockSpec((tile_n, d), x_map),   # x streamed over N
            _const_spec((d, hp)),               # W_emb
            _const_spec((1, hp)),               # b_emb
            _const_spec((hp, hp)),              # W_att1
            _const_spec((1, hp)),               # b_att1
            _const_spec((1, hp)),               # W_att2 as a (1, Hp) row
            _const_spec((1, 1)),                # b_att2
        ],
        out_specs=[
            pl.BlockSpec((1, 1, 1), out_map),   # per-shard running max m
            pl.BlockSpec((1, 1, 1), out_map),   # per-shard exp-sum l
            pl.BlockSpec((1, 1, hp), out_map),  # per-shard unnormalized pooled z
        ],
        scratch_shapes=[
            pltpu.VMEM((1, 1), jnp.float32),
            pltpu.VMEM((1, 1), jnp.float32),
            pltpu.VMEM((1, hp), jnp.float32),
        ],
    )

    m_p, l_p, z_p = pl.pallas_call(
        kernel,
        out_shape=(jax.ShapeDtypeStruct((num_shards, 1, 1), jnp.float32),
                   jax.ShapeDtypeStruct((num_shards, 1, 1), jnp.float32),
                   jax.ShapeDtypeStruct((num_shards, 1, hp), jnp.float32)),
        grid_spec=grid_spec,
        compiler_params=pltpu.CompilerParams(
            dimension_semantics=("parallel", "arbitrary"),
            vmem_limit_bytes=vmem_limit),
        cost_estimate=cost,
    )(x, w1p, b1p, wa1p, ba1p, wa2row, ba2r)

    # ---- tiny f32 epilogue in plain JAX: combine shards, normalize, classify.
    m_p = m_p.reshape(num_shards, 1)
    l_p = l_p.reshape(num_shards, 1)
    z_p = z_p.reshape(num_shards, hp)
    m_g = jnp.max(m_p, axis=0, keepdims=True)
    coeff = jnp.exp(m_p - m_g)                     # empty shards -> exp(-1e30)=0
    l = jnp.sum(coeff * l_p)
    z = jnp.sum(coeff * z_p, axis=0)[:h_dim] / l   # (H,) f32, never down-cast
    return z @ wc.astype(jnp.float32) + bc.astype(jnp.float32)[0]


def init_params(key, input_dim, hidden_dim, num_classes):
    """Deterministic synthetic params. Weights stored as (in, out); biases (1, out)."""
    ks = jax.random.split(key, 8)

    def lin(kw, kb, fan_in, fan_out):
        bound = 1.0 / jnp.sqrt(jnp.float32(fan_in))
        w = jax.random.uniform(kw, (fan_in, fan_out), jnp.float32, -bound, bound)
        b = jax.random.uniform(kb, (1, fan_out), jnp.float32, -bound, bound)
        return w, b

    w1, b1 = lin(ks[0], ks[1], input_dim, hidden_dim)     # embedding Linear
    wa1, ba1 = lin(ks[2], ks[3], hidden_dim, hidden_dim)  # attention Linear 1
    wa2, ba2 = lin(ks[4], ks[5], hidden_dim, 1)           # attention Linear 2 (H -> 1)
    wc, bc = lin(ks[6], ks[7], hidden_dim, num_classes)   # classifier
    return (w1, b1, wa1, ba1, wa2, ba2, wc, bc)


def abmil_ref(x, params):
    """Pure-JAX reference for the correctness check."""
    w1, b1, wa1, ba1, wa2, ba2, wc, bc = params
    h = jnp.maximum(x @ w1 + b1, 0.0)
    a = jnp.tanh(h @ wa1 + ba1) @ wa2 + ba2
    a = jax.nn.softmax(a, axis=0)
    z = jnp.sum(a * h, axis=0)
    return z @ wc + bc[0]


# TODO(synk): `run_in_batches` is host-side Python orchestration (per-bag loop
# over variable-length Python lists), not an op; it is intentionally not a kernel.

if __name__ == "__main__":
    N, INPUT_DIM, HIDDEN_DIM, NUM_CLASSES = 50, 16, 32, 4

    key = jax.random.PRNGKey(0)
    kx, kx2, kp = jax.random.split(key, 3)
    x = jax.random.normal(kx, (N, INPUT_DIM), jnp.float32)
    params = init_params(kp, INPUT_DIM, HIDDEN_DIM, NUM_CLASSES)
    ref = abmil_ref(x, params)

    # f32 path; N=50 with tile_n=16 exercises the partial-tile masking and the
    # 2-shard parallel split (4 tiles -> 2 per shard).
    out = abmil_forward(x, params, tile_n=16, num_shards=2,
                        compute_dtype=jnp.float32)
    out = jax.block_until_ready(out)
    assert out.shape == (NUM_CLASSES,)
    assert jnp.allclose(out, ref, atol=1e-4, rtol=1e-4), (out, ref)

    # bf16 MXU path (default compute dtype), f32 accumulation; looser tolerance.
    out_bf = abmil_forward(x, params, tile_n=16, num_shards=2,
                           compute_dtype=jnp.bfloat16)
    out_bf = jax.block_until_ready(out_bf)
    assert jnp.allclose(out_bf, ref, atol=5e-2, rtol=5e-2), (out_bf, ref)

    # Evenly divisible bag -> the masking code is skipped at trace time.
    x2 = jax.random.normal(kx2, (64, INPUT_DIM), jnp.float32)
    ref2 = abmil_ref(x2, params)
    out2 = jax.block_until_ready(
        abmil_forward(x2, params, tile_n=16, num_shards=2,
                      compute_dtype=jnp.float32))
    assert jnp.allclose(out2, ref2, atol=1e-4, rtol=1e-4), (out2, ref2)

    # Default configuration (auto tile / shard count, bf16 stream).
    out3 = jax.block_until_ready(abmil_forward(x, params))
    assert jnp.allclose(out3, ref, atol=5e-2, rtol=5e-2), (out3, ref)

    print("KERNEL_OK")
</pallas_src>

<mosaic_0001>
module attributes {stable_mosaic.version = 11 : i64} {
  func.func @_abmil_kernel(%arg0: i32, %arg1: i32, %arg2: memref<16x16xf32, #tpu.memory_space<vmem>>, %arg3: memref<16x128xf32, #tpu.memory_space<vmem>>, %arg4: memref<1x128xf32, #tpu.memory_space<vmem>>, %arg5: memref<128x128xf32, #tpu.memory_space<vmem>>, %arg6: memref<1x128xf32, #tpu.memory_space<vmem>>, %arg7: memref<1x128xf32, #tpu.memory_space<vmem>>, %arg8: memref<1x1xf32, #tpu.memory_space<vmem>>, %arg9: memref<1x1x1xf32, #tpu.memory_space<vmem>>, %arg10: memref<1x1x1xf32, #tpu.memory_space<vmem>>, %arg11: memref<1x1x128xf32, #tpu.memory_space<vmem>>, %arg12: memref<1x1xf32, #tpu.memory_space<vmem>>, %arg13: memref<1x1xf32, #tpu.memory_space<vmem>>, %arg14: memref<1x128xf32, #tpu.memory_space<vmem>>) attributes {dimension_semantics = [#tpu.dimension_semantics<parallel>, #tpu.dimension_semantics<arbitrary>], iteration_bounds = array<i64: 2, 2>, scalar_prefetch = 0 : i64, scratch_operands = 3 : i64, tpu.core_type = #tpu.core_type<tc>, window_params = [{transform_indices = @transform_0, window_bounds = array<i64: 16, 16>}, {pipeline_mode = #tpu.pipeline_mode<synchronous>, transform_indices = @transform_1, window_bounds = array<i64: 16, 128>}, {pipeline_mode = #tpu.pipeline_mode<synchronous>, transform_indices = @transform_2, window_bounds = array<i64: 1, 128>}, {pipeline_mode = #tpu.pipeline_mode<synchronous>, transform_indices = @transform_3, window_bounds = array<i64: 128, 128>}, {pipeline_mode = #tpu.pipeline_mode<synchronous>, transform_indices = @transform_4, window_bounds = array<i64: 1, 128>}, {pipeline_mode = #tpu.pipeline_mode<synchronous>, transform_indices = @transform_5, window_bounds = array<i64: 1, 128>}, {pipeline_mode = #tpu.pipeline_mode<synchronous>, transform_indices = @transform_6, window_bounds = array<i64: 1, 1>}, {transform_indices = @transform_7, window_bounds = array<i64: 1, 1, 1>}, {transform_indices = @transform_8, window_bounds = array<i64: 1, 1, 1>}, {transform_indices = @transform_9, window_bounds = array<i64: 1, 1, 128>}]} {
    %c0_i32 = arith.constant 0 : i32
    %0 = arith.cmpi eq, %arg1, %c0_i32 : i32
    %1 = arith.extui %0 : i1 to i32
    %c0_i32_0 = arith.constant 0 : i32
    %2 = arith.cmpi ne, %1, %c0_i32_0 : i32
    scf.if %2 {
      %cst_36 = arith.constant 0xFF800000 : f32
      %66 = vector.broadcast %cst_36 : f32 to vector<1x1xf32>
      %c0_37 = arith.constant 0 : index
      %c0_38 = arith.constant 0 : index
      %67 = vector.load %arg12[%c0_37, %c0_38] : memref<1x1xf32, #tpu.memory_space<vmem>>, vector<1x1xf32>
      tpu.vector_store %arg12[%c0_37, %c0_38], %66 {strides = array<i32>} : memref<1x1xf32, #tpu.memory_space<vmem>>, vector<1x1xf32>,
      %cst_39 = arith.constant 0.000000e+00 : f32
      %68 = vector.broadcast %cst_39 : f32 to vector<1x1xf32>
      %c0_40 = arith.constant 0 : index
      %c0_41 = arith.constant 0 : index
      %69 = vector.load %arg13[%c0_40, %c0_41] : memref<1x1xf32, #tpu.memory_space<vmem>>, vector<1x1xf32>
      tpu.vector_store %arg13[%c0_40, %c0_41], %68 {strides = array<i32>} : memref<1x1xf32, #tpu.memory_space<vmem>>, vector<1x1xf32>,
      %cst_42 = arith.constant 0.000000e+00 : f32
      %70 = vector.broadcast %cst_42 : f32 to vector<1x128xf32>
      %c0_43 = arith.constant 0 : index
      %c0_44 = arith.constant 0 : index
      %71 = vector.load %arg14[%c0_43, %c0_44] : memref<1x128xf32, #tpu.memory_space<vmem>>, vector<1x128xf32>
      tpu.vector_store %arg14[%c0_43, %c0_44], %70 {strides = array<i32>} : memref<1x128xf32, #tpu.memory_space<vmem>>, vector<1x128xf32>,
    } else {
    }
    %c0 = arith.constant 0 : index
    %c0_1 = arith.constant 0 : index
    %3 = vector.load %arg2[%c0, %c0_1] : memref<16x16xf32, #tpu.memory_space<vmem>>, vector<16x16xf32>
    %c0_2 = arith.constant 0 : index
    %c0_3 = arith.constant 0 : index
    %4 = vector.load %arg3[%c0_2, %c0_3] : memref<16x128xf32, #tpu.memory_space<vmem>>, vector<16x128xf32>
    %cst = arith.constant dense<0.000000e+00> : vector<16x128xf32>
    %5 = tpu.matmul %3, %4, %cst {dimension_numbers = #tpu.dot_dimension_numbers<[1], [0], [0], [1], [0, 0, 1, 1], [], []>} : vector<16x16xf32>, vector<16x128xf32>, vector<16x128xf32> -> vector<16x128xf32>
    %c0_4 = arith.constant 0 : index
    %c0_5 = arith.constant 0 : index
    %6 = vector.load %arg4[%c0_4, %c0_5] : memref<1x128xf32, #tpu.memory_space<vmem>>, vector<1x128xf32>
    %7 = vector.broadcast %6 : vector<1x128xf32> to vector<16x128xf32>
    %8 = arith.addf %5, %7 : vector<16x128xf32>
    %cst_6 = arith.constant 0.000000e+00 : f32
    %9 = vector.broadcast %cst_6 : f32 to vector<16x128xf32>
    %10 = arith.maximumf %8, %9 : vector<16x128xf32>
    %c2_i32 = arith.constant 2 : i32
    %11 = arith.muli %arg0, %c2_i32 : i32
    %12 = arith.addi %11, %arg1 : i32
    %c16_i32 = arith.constant 16 : i32
    %13 = arith.muli %12, %c16_i32 : i32
    %14 = tpu.iota {dimensions = array<i32: 0>} : vector<16x1xi32>
    %15 = vector.broadcast %13 : i32 to vector<16x1xi32>
    %16 = arith.addi %15, %14 : vector<16x1xi32>
    %c50_i32 = arith.constant 50 : i32
    %17 = vector.broadcast %c50_i32 : i32 to vector<16x1xi32>
    %18 = arith.cmpi slt, %16, %17 : vector<16x1xi32>
    %cst_7 = arith.constant 0.000000e+00 : f32
    %19 = vector.shape_cast %18 : vector<16x1xi1> to vector<16x1xi1>
    %20 = vector.broadcast %19 : vector<16x1xi1> to vector<16x128xi1>
    %21 = vector.broadcast %cst_7 : f32 to vector<16x128xf32>
    %22 = arith.select %20, %10, %21 : vector<16x128xi1>, vector<16x128xf32>
    %c0_8 = arith.constant 0 : index
    %c0_9 = arith.constant 0 : index
    %23 = vector.load %arg5[%c0_8, %c0_9] : memref<128x128xf32, #tpu.memory_space<vmem>>, vector<128x128xf32>
    %cst_10 = arith.constant dense<0.000000e+00> : vector<16x128xf32>
    %24 = tpu.matmul %22, %23, %cst_10 {dimension_numbers = #tpu.dot_dimension_numbers<[1], [0], [0], [1], [0, 0, 1, 1], [], []>} : vector<16x128xf32>, vector<128x128xf32>, vector<16x128xf32> -> vector<16x128xf32>
    %c0_11 = arith.constant 0 : index
    %c0_12 = arith.constant 0 : index
    %25 = vector.load %arg6[%c0_11, %c0_12] : memref<1x128xf32, #tpu.memory_space<vmem>>, vector<1x128xf32>
    %26 = vector.broadcast %25 : vector<1x128xf32> to vector<16x128xf32>
    %27 = arith.addf %24, %26 : vector<16x128xf32>
    %28 = math.tanh %27 : vector<16x128xf32>
    %c0_13 = arith.constant 0 : index
    %c0_14 = arith.constant 0 : index
    %29 = vector.load %arg7[%c0_13, %c0_14] : memref<1x128xf32, #tpu.memory_space<vmem>>, vector<1x128xf32>
    %30 = vector.broadcast %29 : vector<1x128xf32> to vector<16x128xf32>
    %31 = arith.mulf %28, %30 : vector<16x128xf32>
    %cst_15 = arith.constant dense<0.000000e+00> : vector<16xf32>
    %32 = vector.multi_reduction <add>, %31, %cst_15 [1] : vector<16x128xf32> to vector<16xf32>
    %33 = vector.shape_cast %32 : vector<16xf32> to vector<16x1xf32>
    %c0_16 = arith.constant 0 : index
    %c0_17 = arith.constant 0 : index
    %34 = vector.load %arg8[%c0_16, %c0_17] : memref<1x1xf32, #tpu.memory_space<vmem>>, vector<1x1xf32>
    %35 = vector.broadcast %34 : vector<1x1xf32> to vector<16x1xf32>
    %36 = arith.addf %33, %35 : vector<16x1xf32>
    %cst_18 = arith.constant -1.000000e+30 : f32
    %37 = vector.broadcast %cst_18 : f32 to vector<16x1xf32>
    %38 = arith.select %18, %36, %37 : vector<16x1xi1>, vector<16x1xf32>
    %c0_19 = arith.constant 0 : index
    %c0_20 = arith.constant 0 : index
    %39 = vector.load %arg12[%c0_19, %c0_20] : memref<1x1xf32, #tpu.memory_space<vmem>>, vector<1x1xf32>
    %cst_21 = arith.constant dense<0xFF800000> : vector<1xf32>
    %40 = vector.multi_reduction <maximumf>, %38, %cst_21 [0] : vector<16x1xf32> to vector<1xf32>
    %41 = vector.shape_cast %40 : vector<1xf32> to vector<1x1xf32>
    %42 = arith.maximumf %39, %41 : vector<1x1xf32>
    %43 = arith.subf %39, %42 : vector<1x1xf32>
    %44 = math.exp %43 : vector<1x1xf32>
    %45 = vector.broadcast %42 : vector<1x1xf32> to vector<16x1xf32>
    %46 = arith.subf %38, %45 : vector<16x1xf32>
    %47 = math.exp %46 : vector<16x1xf32>
    %cst_22 = arith.constant 0.000000e+00 : f32
    %48 = vector.broadcast %cst_22 : f32 to vector<16x1xf32>
    %49 = arith.select %18, %47, %48 : vector<16x1xi1>, vector<16x1xf32>
    %c0_23 = arith.constant 0 : index
    %c0_24 = arith.constant 0 : index
    %50 = vector.load %arg13[%c0_23, %c0_24] : memref<1x1xf32, #tpu.memory_space<vmem>>, vector<1x1xf32>
    %51 = arith.mulf %44, %50 : vector<1x1xf32>
    %cst_25 = arith.constant dense<0.000000e+00> : vector<1xf32>
    %52 = vector.multi_reduction <add>, %49, %cst_25 [0] : vector<16x1xf32> to vector<1xf32>
    %53 = vector.shape_cast %52 : vector<1xf32> to vector<1x1xf32>
    %54 = arith.addf %51, %53 : vector<1x1xf32>
    %c0_26 = arith.constant 0 : index
    %c0_27 = arith.constant 0 : index
    %55 = vector.load %arg13[%c0_26, %c0_27] : memref<1x1xf32, #tpu.memory_space<vmem>>, vector<1x1xf32>
    tpu.vector_store %arg13[%c0_26, %c0_27], %54 {strides = array<i32>} : memref<1x1xf32, #tpu.memory_space<vmem>>, vector<1x1xf32>,
    %c0_28 = arith.constant 0 : index
    %c0_29 = arith.constant 0 : index
    %56 = vector.load %arg14[%c0_28, %c0_29] : memref<1x128xf32, #tpu.memory_space<vmem>>, vector<1x128xf32>
    %57 = vector.broadcast %44 : vector<1x1xf32> to vector<1x128xf32>
    %58 = arith.mulf %57, %56 : vector<1x128xf32>
    %cst_30 = arith.constant dense<0.000000e+00> : vector<1x128xf32>
    %59 = tpu.matmul %49, %22, %cst_30 {dimension_numbers = #tpu.dot_dimension_numbers<[0], [0], [1], [1], [0, 1, 1, 1], [], []>} : vector<16x1xf32>, vector<16x128xf32>, vector<1x128xf32> -> vector<1x128xf32>
    %60 = arith.addf %58, %59 : vector<1x128xf32>
    %c0_31 = arith.constant 0 : index
    %c0_32 = arith.constant 0 : index
    %61 = vector.load %arg14[%c0_31, %c0_32] : memref<1x128xf32, #tpu.memory_space<vmem>>, vector<1x128xf32>
    tpu.vector_store %arg14[%c0_31, %c0_32], %60 {strides = array<i32>} : memref<1x128xf32, #tpu.memory_space<vmem>>, vector<1x128xf32>,
    %c0_33 = arith.constant 0 : index
    %c0_34 = arith.constant 0 : index
    %62 = vector.load %arg12[%c0_33, %c0_34] : memref<1x1xf32, #tpu.memory_space<vmem>>, vector<1x1xf32>
    tpu.vector_store %arg12[%c0_33, %c0_34], %42 {strides = array<i32>} : memref<1x1xf32, #tpu.memory_space<vmem>>, vector<1x1xf32>,
    %c1_i32 = arith.constant 1 : i32
    %63 = arith.cmpi eq, %arg1, %c1_i32 : i32
    %64 = arith.extui %63 : i1 to i32
    %c0_i32_35 = arith.constant 0 : i32
    %65 = arith.cmpi ne, %64, %c0_i32_35 : i32
    scf.if %65 {
      %c0_36 = arith.constant 0 : index
      %c0_37 = arith.constant 0 : index
      %66 = vector.load %arg12[%c0_36, %c0_37] : memref<1x1xf32, #tpu.memory_space<vmem>>, vector<1x1xf32>
      %c0_38 = arith.constant 0 : index
      %c0_39 = arith.constant 0 : index
      %c0_40 = arith.constant 0 : index
      %67 = vector.load %arg9[%c0_38, %c0_39, %c0_40] : memref<1x1x1xf32, #tpu.memory_space<vmem>>, vector<1x1x1xf32>
      %68 = vector.shape_cast %67 : vector<1x1x1xf32> to vector<1x1xf32>
      %69 = vector.shape_cast %66 : vector<1x1xf32> to vector<1x1x1xf32>
      tpu.vector_store %arg9[%c0_38, %c0_39, %c0_40], %69 {strides = array<i32>} : memref<1x1x1xf32, #tpu.memory_space<vmem>>, vector<1x1x1xf32>,
      %c0_41 = arith.constant 0 : index
      %c0_42 = arith.constant 0 : index
      %70 = vector.load %arg13[%c0_41, %c0_42] : memref<1x1xf32, #tpu.memory_space<vmem>>, vector<1x1xf32>
      %c0_43 = arith.constant 0 : index
      %c0_44 = arith.constant 0 : index
      %c0_45 = arith.constant 0 : index
      %71 = vector.load %arg10[%c0_43, %c0_44, %c0_45] : memref<1x1x1xf32, #tpu.memory_space<vmem>>, vector<1x1x1xf32>
      %72 = vector.shape_cast %71 : vector<1x1x1xf32> to vector<1x1xf32>
      %73 = vector.shape_cast %70 : vector<1x1xf32> to vector<1x1x1xf32>
      tpu.vector_store %arg10[%c0_43, %c0_44, %c0_45], %73 {strides = array<i32>} : memref<1x1x1xf32, #tpu.memory_space<vmem>>, vector<1x1x1xf32>,
      %c0_46 = arith.constant 0 : index
      %c0_47 = arith.constant 0 : index
      %74 = vector.load %arg14[%c0_46, %c0_47] : memref<1x128xf32, #tpu.memory_space<vmem>>, vector<1x128xf32>
      %c0_48 = arith.constant 0 : index
      %c0_49 = arith.constant 0 : index
      %c0_50 = arith.constant 0 : index
      %75 = vector.load %arg11[%c0_48, %c0_49, %c0_50] : memref<1x1x128xf32, #tpu.memory_space<vmem>>, vector<1x1x128xf32>
      %76 = vector.shape_cast %75 : vector<1x1x128xf32> to vector<1x128xf32>
      %77 = vector.shape_cast %74 : vector<1x128xf32> to vector<1x1x128xf32>
      tpu.vector_store %arg11[%c0_48, %c0_49, %c0_50], %77 {strides = array<i32>} : memref<1x1x128xf32, #tpu.memory_space<vmem>>, vector<1x1x128xf32>,
    } else {
    }
    return
  }
  func.func @transform_0(%arg0: i32, %arg1: i32) -> (i32, i32) {
    %c2_i32 = arith.constant 2 : i32
    %0 = arith.muli %arg0, %c2_i32 : i32
    %1 = arith.addi %0, %arg1 : i32
    %c0_i32 = arith.constant 0 : i32
    %c0_i32_0 = arith.constant 0 : i32
    return %1, %c0_i32 : i32, i32
  }
  func.func @transform_1(%arg0: i32, %arg1: i32) -> (i32, i32) {
    %c0_i32 = arith.constant 0 : i32
    %c0_i32_0 = arith.constant 0 : i32
    %c0_i32_1 = arith.constant 0 : i32
    return %c0_i32, %c0_i32_0 : i32, i32
  }
  func.func @transform_2(%arg0: i32, %arg1: i32) -> (i32, i32) {
    %c0_i32 = arith.constant 0 : i32
    %c0_i32_0 = arith.constant 0 : i32
    %c0_i32_1 = arith.constant 0 : i32
    return %c0_i32, %c0_i32_0 : i32, i32
  }
  func.func @transform_3(%arg0: i32, %arg1: i32) -> (i32, i32) {
    %c0_i32 = arith.constant 0 : i32
    %c0_i32_0 = arith.constant 0 : i32
    %c0_i32_1 = arith.constant 0 : i32
    return %c0_i32, %c0_i32_0 : i32, i32
  }
  func.func @transform_4(%arg0: i32, %arg1: i32) -> (i32, i32) {
    %c0_i32 = arith.constant 0 : i32
    %c0_i32_0 = arith.constant 0 : i32
    %c0_i32_1 = arith.constant 0 : i32
    return %c0_i32, %c0_i32_0 : i32, i32
  }
  func.func @transform_5(%arg0: i32, %arg1: i32) -> (i32, i32) {
    %c0_i32 = arith.constant 0 : i32
    %c0_i32_0 = arith.constant 0 : i32
    %c0_i32_1 = arith.constant 0 : i32
    return %c0_i32, %c0_i32_0 : i32, i32
  }
  func.func @transform_6(%arg0: i32, %arg1: i32) -> (i32, i32) {
    %c0_i32 = arith.constant 0 : i32
    %c0_i32_0 = arith.constant 0 : i32
    %c0_i32_1 = arith.constant 0 : i32
    return %c0_i32, %c0_i32_0 : i32, i32
  }
  func.func @transform_7(%arg0: i32, %arg1: i32) -> (i32, i32, i32) {
    %c0_i32 = arith.constant 0 : i32
    %c0_i32_0 = arith.constant 0 : i32
    %c0_i32_1 = arith.constant 0 : i32
    return %arg0, %c0_i32, %c0_i32_0 : i32, i32, i32
  }
  func.func @transform_8(%arg0: i32, %arg1: i32) -> (i32, i32, i32) {
    %c0_i32 = arith.constant 0 : i32
    %c0_i32_0 = arith.constant 0 : i32
    %c0_i32_1 = arith.constant 0 : i32
    return %arg0, %c0_i32, %c0_i32_0 : i32, i32, i32
  }
  func.func @transform_9(%arg0: i32, %arg1: i32) -> (i32, i32, i32) {
    %c0_i32 = arith.constant 0 : i32
    %c0_i32_0 = arith.constant 0 : i32
    %c0_i32_1 = arith.constant 0 : i32
    return %arg0, %c0_i32, %c0_i32_0 : i32, i32, i32
  }
}

</mosaic_0001>

<llo_original>
// kernel: tpu_custom_call.1
$region0: #{tpu_custom_call.1}
  #allocation0 [shape = 'u32[]', space=smem, size = 0x4, offset = 0x4, fixed_abs, tag = 'smem constant byte address 0x4 - core index']
  #allocation1 [shape = 'u32[144,128]{1,0:T(1,128)}', space=vmem, size = 0x12000, scoped, tag = 'internal scratch']
  #allocation2 [shape = 'f32[1,1]{1,0:T(1,128)}', space=vmem, size = 0x200, scoped, tag = 'scratch operand']
  #allocation3 [shape = 'f32[1,1]{1,0:T(1,128)}', space=vmem, size = 0x200, scoped, tag = 'scratch operand']
  #allocation4 [shape = 'f32[1,128]{1,0:T(1,128)}', space=vmem, size = 0x200, scoped, tag = 'scratch operand']
  #allocation5 [shape = 'f32[1,1]{1,0:T(1,128)S(1)}', space=vmem, size = 0x200, scoped, tag = 'scoped memory for tpu_custom_call.1']
  %s0 = inlined_call_operand.vmem [shape: f32[50,16], index: 0, kind: input, shape index: {}]
  %s1 = inlined_call_operand.vmem [shape: f32[16,128], index: 1, kind: input, shape index: {}]
  %s2 = inlined_call_operand.vmem [shape: f32[1,128], index: 2, kind: input, shape index: {}]
  %s3 = inlined_call_operand.hbm [shape: f32[128,128], index: 3, kind: input, shape index: {}]
  %s4 = inlined_call_operand.vmem [shape: f32[1,128], index: 4, kind: input, shape index: {}]
  %s5 = inlined_call_operand.vmem [shape: f32[1,128], index: 5, kind: input, shape index: {}]
  %s6 = inlined_call_operand.<no memory space> [shape: f32[1,1], index: 6, kind: input, shape index: {}]
  %s7 = inlined_call_operand.vmem [shape: f32[2,1,1], index: 7, kind: output, shape index: {0}]
  %s8 = inlined_call_operand.vmem [shape: f32[2,1,1], index: 8, kind: output, shape index: {1}]
  %s9 = inlined_call_operand.hbm [shape: f32[2,1,128], index: 9, kind: output, shape index: {2}]
  %10 = xla_tuple %s7, %s8, %s9
  %s11 = sld [smem:[#allocation0]]
  $region89: #{tpu_custom_call.1} parent=0
    _
  %s13 = ssub.s32 1, %s11
  %s14 = scalar_select 0, %s13, %s11
  %v15 = vstv %s6
  %16 = vst [vmem:[#allocation5] sm:$0x1] %v15
  $region1: #{tpu_custom_call.1} parent=0
    #allocation6 [shape = 'u8[65536]{0}', space=vmem, size = 0x10000, scoped, tag = 'input window, operand 3, single buffered']
    #allocation7 [shape = 's32[2]{0}', space=sflag, size = 0x8, scoped, tag = 'scoped memory for tpu_custom_call.1']
    #allocation8 [shape = 's32[2]{0}', space=sflag, size = 0x8, scoped, tag = 'scoped memory for tpu_custom_call.1']
    #allocation9 [shape = 'u8[1024]{0}', space=vmem, size = 0x400, scoped, tag = 'output window, operand 2']
    %17 = vsyncpa [#allocation7], 0
    %18 = vsyncpa [#allocation8], 0
    %s19 = scalar_lea.sflag [#allocation8], 1
    %20 = vsyncpa %s19, 0
    loop: start=0, step=1, limit=6
    $region2: #{tpu_custom_call.1} parent=1 // loop_pre_header
      _
    $region3: #{tpu_custom_call.1} parent=1 // loop_header
      %s22 = sphi 0, %s26
      %p23 = scmp.ge.s32.totalorder %s22, 6
      %s29 = sphi 0, %s41
      %s30 = sphi 0, %s37
      %s31 = sphi 0, %s29
      %s32 = sphi 0, %s30
      %s33 = sphi 0, %s31
      %s34 = sphi 0, %s32
      %s48 = sphi 0, %s50
      %s51 = sphi 0, %s48
      %s52 = sphi 0, %s51
      %s68 = sphi 0, %s52
      %s72 = sphi 0, %s72
      %s74 = sphi 0, %s72
      %s75 = sphi 0, %s74
      %s89 = sphi 0, %s75
      %s93 = sphi 0, %s93
      %s95 = sphi 0, %s93
      %s96 = sphi 0, %s95
      %s110 = sphi 0, %s96
      %s114 = sphi 0, %s114
      %s116 = sphi 0, %s114
      %s117 = sphi 0, %s116
      %s131 = sphi 0, %s117
      %s135 = sphi 0, %s135
      %s137 = sphi 0, %s135
      %s138 = sphi 0, %s137
      %s152 = sphi 0, %s138
      %s156 = sphi 0, %s156
      %s158 = sphi 0, %s156
      %s159 = sphi 0, %s158
      %s173 = sphi 0, %s159
      %s177 = sphi 0, %s177
      %s179 = sphi 0, %s177
      %s180 = sphi 0, %s179
      %s194 = sphi 0, %s180
      %s200 = sphi 0, %s202
      %s203 = sphi 0, %s200
      %s204 = sphi 0, %s203
      %s220 = sphi 0, %s204
      %s226 = sphi 0, %s228
      %s229 = sphi 0, %s226
      %s230 = sphi 0, %s229
      %s246 = sphi 0, %s230
      %s252 = sphi 0, %s254
      %s255 = sphi 0, %s252
      %s256 = sphi 0, %s255
      %s272 = sphi 0, %s256
    $region4: #{tpu_custom_call.1} parent=1 // loop_header_branch
      %25 = sbr.rel (%p23) target = $region8
    $region5: #{tpu_custom_call.1} parent=1 // loop_body
      %s27 = ssub.s32 %s22, 1
      %s28 = ssub.s32 %s22, 2
      %s35 = sadd.s32 1, %s30
      %p36 = scmp.ge.s32.totalorder %s35, 2
      %s37 = scalar_select %p36, 0, %s35
      %s38 = sadd.s32 1, %s29
      %s39 = scalar_select %p36, %s38, %s29
      %p40 = scmp.ge.s32.totalorder %s39, 2
      %s41 = scalar_select %p40, 0, %s39
      %s42 = smul.u32 %s29, 2
      %s43 = sadd.s32 %s42, %s30
      %s44 = smul.u32 %s41, 2
      %s45 = sadd.s32 %s44, %s37
      %s46 = ssub.s32 %s43, %s45
      %p47 = scmp.eq.s32.totalorder %s46, 0
      %s49 = sadd.s32 %s48, 1
      %s50 = scalar_select %p47, %s48, %s49
      %p53 = pneg %p47
      %p54 = scmp.eq.s32.totalorder %s22, 3
      %p55 = por %p53, %p54
      %p56 = scmp.ne.s32.totalorder %s48, %s51
      %p57 = scmp.eq.s32.totalorder %s22, 0
      %p58 = por %p56, %p57
      %p59 = scmp.ne.s32.totalorder %s48, %s51
      %p60 = scmp.eq.s32.totalorder %s27, 3
      %p61 = por %p59, %p60
      %p62 = scmp.ne.s32.totalorder %s51, %s52
      %p63 = scmp.eq.s32.totalorder %s27, 0
      %p64 = por %p62, %p63
      %p65 = scmp.ne.s32.totalorder %s51, %s52
      %p66 = scmp.eq.s32.totalorder %s28, 3
      %p67 = por %p65, %p66
      %p69 = scmp.ne.s32.totalorder %s52, %s68
      %p70 = scmp.eq.s32.totalorder %s28, 0
      %p71 = por %p69, %p70
      %s73 = sadd.s32 %s72, 1
      %p76 = scmp.eq.s32.totalorder %s22, 3
      %p77 = scmp.ne.s32.totalorder %s72, %s74
      %p78 = scmp.eq.s32.totalorder %s22, 0
      %p79 = por %p77, %p78
      %p80 = scmp.ne.s32.totalorder %s72, %s74
      %p81 = scmp.eq.s32.totalorder %s27, 3
      %p82 = por %p80, %p81
      %p83 = scmp.ne.s32.totalorder %s74, %s75
      %p84 = scmp.eq.s32.totalorder %s27, 0
      %p85 = por %p83, %p84
      %p86 = scmp.ne.s32.totalorder %s74, %s75
      %p87 = scmp.eq.s32.totalorder %s28, 3
      %p88 = por %p86, %p87
      %p90 = scmp.ne.s32.totalorder %s75, %s89
      %p91 = scmp.eq.s32.totalorder %s28, 0
      %p92 = por %p90, %p91
      %s94 = sadd.s32 %s93, 1
      %p97 = scmp.eq.s32.totalorder %s22, 3
      %p98 = scmp.ne.s32.totalorder %s93, %s95
      %p99 = scmp.eq.s32.totalorder %s22, 0
      %p100 = por %p98, %p99
      %p101 = scmp.ne.s32.totalorder %s93, %s95
      %p102 = scmp.eq.s32.totalorder %s27, 3
      %p103 = por %p101, %p102
      %p104 = scmp.ne.s32.totalorder %s95, %s96
      %p105 = scmp.eq.s32.totalorder %s27, 0
      %p106 = por %p104, %p105
      %p107 = scmp.ne.s32.totalorder %s95, %s96
      %p108 = scmp.eq.s32.totalorder %s28, 3
      %p109 = por %p107, %p108
      %p111 = scmp.ne.s32.totalorder %s96, %s110
      %p112 = scmp.eq.s32.totalorder %s28, 0
      %p113 = por %p111, %p112
      %s115 = sadd.s32 %s114, 1
      %p118 = scmp.eq.s32.totalorder %s22, 3
      %p119 = scmp.ne.s32.totalorder %s114, %s116
      %p120 = scmp.eq.s32.totalorder %s22, 0
      %p121 = por %p119, %p120
      %p122 = scmp.ne.s32.totalorder %s114, %s116
      %p123 = scmp.eq.s32.totalorder %s27, 3
      %p124 = por %p122, %p123
      %p125 = scmp.ne.s32.totalorder %s116, %s117
      %p126 = scmp.eq.s32.totalorder %s27, 0
      %p127 = por %p125, %p126
      %p128 = scmp.ne.s32.totalorder %s116, %s117
      %p129 = scmp.eq.s32.totalorder %s28, 3
      %p130 = por %p128, %p129
      %p132 = scmp.ne.s32.totalorder %s117, %s131
      %p133 = scmp.eq.s32.totalorder %s28, 0
      %p134 = por %p132, %p133
      %s136 = sadd.s32 %s135, 1
      %p139 = scmp.eq.s32.totalorder %s22, 3
      %p140 = scmp.ne.s32.totalorder %s135, %s137
      %p141 = scmp.eq.s32.totalorder %s22, 0
      %p142 = por %p140, %p141
      %p143 = scmp.ne.s32.totalorder %s135, %s137
      %p144 = scmp.eq.s32.totalorder %s27, 3
      %p145 = por %p143, %p144
      %p146 = scmp.ne.s32.totalorder %s137, %s138
      %p147 = scmp.eq.s32.totalorder %s27, 0
      %p148 = por %p146, %p147
      %p149 = scmp.ne.s32.totalorder %s137, %s138
      %p150 = scmp.eq.s32.totalorder %s28, 3
      %p151 = por %p149, %p150
      %p153 = scmp.ne.s32.totalorder %s138, %s152
      %p154 = scmp.eq.s32.totalorder %s28, 0
      %p155 = por %p153, %p154
      %s157 = sadd.s32 %s156, 1
      %p160 = scmp.eq.s32.totalorder %s22, 3
      %p161 = scmp.ne.s32.totalorder %s156, %s158
      %p162 = scmp.eq.s32.totalorder %s22, 0
      %p163 = por %p161, %p162
      %p164 = scmp.ne.s32.totalorder %s156, %s158
      %p165 = scmp.eq.s32.totalorder %s27, 3
      %p166 = por %p164, %p165
      %p167 = scmp.ne.s32.totalorder %s158, %s159
      %p168 = scmp.eq.s32.totalorder %s27, 0
      %p169 = por %p167, %p168
      %p170 = scmp.ne.s32.totalorder %s158, %s159
      %p171 = scmp.eq.s32.totalorder %s28, 3
      %p172 = por %p170, %p171
      %p174 = scmp.ne.s32.totalorder %s159, %s173
      %p175 = scmp.eq.s32.totalorder %s28, 0
      %p176 = por %p174, %p175
      %s178 = sadd.s32 %s177, 1
      %p181 = scmp.eq.s32.totalorder %s22, 3
      %p182 = scmp.ne.s32.totalorder %s177, %s179
      %p183 = scmp.eq.s32.totalorder %s22, 0
      %p184 = por %p182, %p183
      %p185 = scmp.ne.s32.totalorder %s177, %s179
      %p186 = scmp.eq.s32.totalorder %s27, 3
      %p187 = por %p185, %p186
      %p188 = scmp.ne.s32.totalorder %s179, %s180
      %p189 = scmp.eq.s32.totalorder %s27, 0
      %p190 = por %p188, %p189
      %p191 = scmp.ne.s32.totalorder %s179, %s180
      %p192 = scmp.eq.s32.totalorder %s28, 3
      %p193 = por %p191, %p192
      %p195 = scmp.ne.s32.totalorder %s180, %s194
      %p196 = scmp.eq.s32.totalorder %s28, 0
      %p197 = por %p195, %p196
      %s198 = ssub.s32 %s29, %s41
      %p199 = scmp.eq.s32.totalorder %s198, 0
      %s201 = sadd.s32 %s200, 1
      %s202 = scalar_select %p199, %s200, %s201
      %p205 = pneg %p199
      %p206 = scmp.eq.s32.totalorder %s22, 3
      %p207 = por %p205, %p206
      %p208 = scmp.ne.s32.totalorder %s200, %s203
      %p209 = scmp.eq.s32.totalorder %s22, 0
      %p210 = por %p208, %p209
      %p211 = scmp.ne.s32.totalorder %s200, %s203
      %p212 = scmp.eq.s32.totalorder %s27, 3
      %p213 = por %p211, %p212
      %p214 = scmp.ne.s32.totalorder %s203, %s204
      %p215 = scmp.eq.s32.totalorder %s27, 0
      %p216 = por %p214, %p215
      %p217 = scmp.ne.s32.totalorder %s203, %s204
      %p218 = scmp.eq.s32.totalorder %s28, 3
      %p219 = por %p217, %p218
      %p221 = scmp.ne.s32.totalorder %s204, %s220
      %p222 = scmp.eq.s32.totalorder %s28, 0
      %p223 = por %p221, %p222
      %s224 = ssub.s32 %s29, %s41
      %p225 = scmp.eq.s32.totalorder %s224, 0
      %s227 = sadd.s32 %s226, 1
      %s228 = scalar_select %p225, %s226, %s227
      %p231 = pneg %p225
      %p232 = scmp.eq.s32.totalorder %s22, 3
      %p233 = por %p231, %p232
      %p234 = scmp.ne.s32.totalorder %s226, %s229
      %p235 = scmp.eq.s32.totalorder %s22, 0
      %p236 = por %p234, %p235
      %p237 = scmp.ne.s32.totalorder %s226, %s229
      %p238 = scmp.eq.s32.totalorder %s27, 3
      %p239 = por %p237, %p238
      %p240 = scmp.ne.s32.totalorder %s229, %s230
      %p241 = scmp.eq.s32.totalorder %s27, 0
      %p242 = por %p240, %p241
      %p243 = scmp.ne.s32.totalorder %s229, %s230
      %p244 = scmp.eq.s32.totalorder %s28, 3
      %p245 = por %p243, %p244
      %p247 = scmp.ne.s32.totalorder %s230, %s246
      %p248 = scmp.eq.s32.totalorder %s28, 0
      %p249 = por %p247, %p248
      %s250 = ssub.s32 %s29, %s41
      %p251 = scmp.eq.s32.totalorder %s250, 0
      %s253 = sadd.s32 %s252, 1
      %s254 = scalar_select %p251, %s252, %s253
      %p257 = pneg %p251
      %p258 = scmp.eq.s32.totalorder %s22, 3
      %p259 = por %p257, %p258
      %p260 = scmp.ne.s32.totalorder %s252, %s255
      %p261 = scmp.eq.s32.totalorder %s22, 0
      %p262 = por %p260, %p261
      %p263 = scmp.ne.s32.totalorder %s252, %s255
      %p264 = scmp.eq.s32.totalorder %s27, 3
      %p265 = por %p263, %p264
      %p266 = scmp.ne.s32.totalorder %s255, %s256
      %p267 = scmp.eq.s32.totalorder %s27, 0
      %p268 = por %p266, %p267
      %p269 = scmp.ne.s32.totalorder %s255, %s256
      %p270 = scmp.eq.s32.totalorder %s28, 3
      %p271 = por %p269, %p270
      %p273 = scmp.ne.s32.totalorder %s256, %s272
      %p274 = scmp.eq.s32.totalorder %s28, 0
      %p275 = por %p273, %p274
      %p276 = scmp.le.s32.totalorder 1, %s22
      %p277 = scmp.lt.s32.totalorder %s22, 5
      %p278 = pnand %p276, %p277
      %p279 = pneg %p278
      // Predicated region
      $region9: #{tpu_custom_call.1} parent=5 // pred_check
        _
      $region10: #{tpu_custom_call.1} parent=5 // pred_check_branch
        %281 = sbr.rel (%p278) target = $region12
      $region11: #{tpu_custom_call.1} parent=5 // pred_region
        %s282 = ssub.s32 %s22, 1
        // Predicated region
        $region13: #{tpu_custom_call.1} parent=11 // pred_check
          %p283 = pneg %p85
        $region14: #{tpu_custom_call.1} parent=11 // pred_check_branch
          %285 = sbr.rel (%p283) target = $region16
        $region15: #{tpu_custom_call.1} parent=11 // pred_region
          _
        $region16: #{tpu_custom_call.1} parent=11 // pred_fallthru
          _
        // Predicated region
        $region17: #{tpu_custom_call.1} parent=11 // pred_check
          %p286 = pneg %p106
        $region18: #{tpu_custom_call.1} parent=11 // pred_check_branch
          %288 = sbr.rel (%p286) target = $region20
        $region19: #{tpu_custom_call.1} parent=11 // pred_region
          _
        $region20: #{tpu_custom_call.1} parent=11 // pred_fallthru
          _
        // Predicated region
        $region21: #{tpu_custom_call.1} parent=11 // pred_check
          %p289 = pneg %p127
        $region22: #{tpu_custom_call.1} parent=11 // pred_check_branch
          %291 = sbr.rel (%p289) target = $region24
        $region23: #{tpu_custom_call.1} parent=11 // pred_region
          %s293 = ssub.s32 2048, 2048
          %294 = vsyncadd [#allocation7], %s293
          %s295 = sshll.u32 [#allocation6], 4
          %s296 = int_to_ptr.vmem [resolvable:$true] %s295
          %301 = dma.hbm_to_vmem [thread:$0]  %s3, 2048, %s296, [#allocation7], 128, 128, 8
        $region24: #{tpu_custom_call.1} parent=11 // pred_fallthru
          _
        // Predicated region
        $region25: #{tpu_custom_call.1} parent=11 // pred_check
          %p302 = pneg %p148
        $region26: #{tpu_custom_call.1} parent=11 // pred_check_branch
          %304 = sbr.rel (%p302) target = $region28
        $region27: #{tpu_custom_call.1} parent=11 // pred_region
          _
        $region28: #{tpu_custom_call.1} parent=11 // pred_fallthru
          _
        // Predicated region
        $region29: #{tpu_custom_call.1} parent=11 // pred_check
          %p305 = pneg %p169
        $region30: #{tpu_custom_call.1} parent=11 // pred_check_branch
          %307 = sbr.rel (%p305) target = $region32
        $region31: #{tpu_custom_call.1} parent=11 // pred_region
          _
        $region32: #{tpu_custom_call.1} parent=11 // pred_fallthru
          _
        // Predicated region
        $region33: #{tpu_custom_call.1} parent=11 // pred_check
          %p308 = pneg %p190
        $region34: #{tpu_custom_call.1} parent=11 // pred_check_branch
          %310 = sbr.rel (%p308) target = $region36
        $region35: #{tpu_custom_call.1} parent=11 // pred_region
          _
        $region36: #{tpu_custom_call.1} parent=11 // pred_fallthru
          _
      $region12: #{tpu_custom_call.1} parent=5 // pred_fallthru
        _
      %p311 = scmp.lt.s32.totalorder %s22, 4
      // Predicated region
      $region37: #{tpu_custom_call.1} parent=5 // pred_check
        %p312 = pneg %p311
      $region38: #{tpu_custom_call.1} parent=5 // pred_check_branch
        %314 = sbr.rel (%p312) target = $region40
      $region39: #{tpu_custom_call.1} parent=5 // pred_region
        // Predicated region
        $region41: #{tpu_custom_call.1} parent=39 // pred_check
          %p315 = pneg %p58
        $region42: #{tpu_custom_call.1} parent=39 // pred_check_branch
          %317 = sbr.rel (%p315) target = $region44
        $region43: #{tpu_custom_call.1} parent=39 // pred_region
          %s318 = smul.u32 %s29, 2
          %s319 = sadd.s32 %s318, %s30
          %s320 = smul.u32 2, %s319
          %s321 = ssub.s32 7, %s320
          %p322 = scmp.lt.s32.totalorder %s321, 2
          %s323 = scalar_select %p322, %s321, 2
          %s324 = smul.u32 128, %s323
          %p325 = scmp.lt.s32.totalorder %s320, 6
          %s326 = scalar_select %p325, %s320, 6
          %s327 = smul.addr %s326, 8
          %s328 = scalar_lea.vmem %s0, %s327
          %s329 = smul.u32 %s29, 2
          %s330 = sadd.s32 %s329, %s30
          %s331 = smul.u32 2, %s330
          %s332 = ssub.s32 7, %s331
          %p333 = scmp.lt.s32.totalorder %s332, 2
          %s334 = scalar_select %p333, %s332, 2
          %s335 = smul.u32 128, %s334
        $region44: #{tpu_custom_call.1} parent=39 // pred_fallthru
          _
      $region40: #{tpu_custom_call.1} parent=5 // pred_fallthru
        _
      %p336 = scmp.le.s32.totalorder 1, %s22
      %p337 = scmp.lt.s32.totalorder %s22, 5
      %p338 = pnand %p336, %p337
      %p339 = pneg %p338
      // Predicated region
      $region45: #{tpu_custom_call.1} parent=5 // pred_check
        _
      $region46: #{tpu_custom_call.1} parent=5 // pred_check_branch
        %341 = sbr.rel (%p338) target = $region48
      $region47: #{tpu_custom_call.1} parent=5 // pred_region
        %s342 = ssub.s32 %s22, 1
        // Predicated region
        $region49: #{tpu_custom_call.1} parent=47 // pred_check
          %p343 = pneg %p127
        $region50: #{tpu_custom_call.1} parent=47 // pred_check_branch
          %345 = sbr.rel (%p343) target = $region52
        $region51: #{tpu_custom_call.1} parent=47 // pred_region
          %346 = dma.done [#allocation7], 2048
        $region52: #{tpu_custom_call.1} parent=47 // pred_fallthru
          _
        %s347 = smul.u32 %s31, 2
        %s348 = sadd.s32 %s347, %s32
        %s349 = smul.u32 2, %s348
        %s350 = ssub.s32 7, %s349
        %p351 = scmp.lt.s32.totalorder %s350, 2
        %s352 = scalar_select %p351, %s350, 2
        %s353 = smul.u32 128, %s352
        %p354 = scmp.lt.s32.totalorder %s349, 6
        %s355 = scalar_select %p354, %s349, 6
        %s356 = smul.addr %s355, 8
        %s357 = scalar_lea.vmem %s0, %s356
        %p358 = pneg %p64
        %p359 = pneg %p61
        %p360 = pneg %p85
        %p361 = pneg %p82
        %p362 = pneg %p106
        %p363 = pneg %p103
        %p364 = pneg %p127
        %p365 = pneg %p124
        %p366 = pneg %p148
        %p367 = pneg %p145
        %p368 = pneg %p169
        %p369 = pneg %p166
        %p370 = pneg %p190
        %p371 = pneg %p187
        %p372 = pneg %p216
        %p373 = pneg %p213
        %p374 = scmp.lt.s32.totalorder %s31, 1
        %s375 = scalar_select %p374, %s31, 1
        %s376 = scalar_lea.vmem %s7, %s375
        %p377 = pneg %p242
        %p378 = pneg %p239
        %p379 = scmp.lt.s32.totalorder %s31, 1
        %s380 = scalar_select %p379, %s31, 1
        %s381 = scalar_lea.vmem %s8, %s380
        %p382 = pneg %p268
        %p383 = pneg %p265
        %s384 = sand.u32 %s255, 1
        %s385 = scalar_lea.sflag [#allocation8], %s384
        %s386 = sand.u32 %s255, 1
        %s387 = scalar_lea.vmem [#allocation9], %s386
        %s388 = smul.u32 %s31, 2
        %s389 = sadd.s32 %s388, %s32
        %s390 = smul.u32 2, %s389
        %s391 = ssub.s32 7, %s390
        %p392 = scmp.lt.s32.totalorder %s391, 2
        %s393 = scalar_select %p392, %s391, 2
        %s394 = smul.u32 128, %s393
        %p395 = scmp.lt.s32.totalorder %s390, 6
        %s396 = scalar_select %p395, %s390, 6
        %s397 = smul.addr %s396, 8
        %s398 = scalar_lea.vmem %s0, %s397
        %s399 = smul.u32 %s31, 2
        %s400 = sadd.s32 %s399, %s32
        %s401 = smul.u32 2, %s400
        %s402 = ssub.s32 7, %s401
        %p403 = scmp.lt.s32.totalorder %s402, 2
        %s404 = scalar_select %p403, %s402, 2
        %s405 = smul.u32 128, %s404
        %p406 = scmp.lt.s32.totalorder %s31, 1
        %s407 = scalar_select %p406, %s31, 1
        %s408 = scalar_lea.vmem %s7, %s407
        %p409 = scmp.lt.s32.totalorder %s31, 1
        %s410 = scalar_select %p409, %s31, 1
        %s411 = scalar_lea.vmem %s8, %s410
        %p412 = scmp.eq.s32.totalorder %s32, 0
        // Predicated region
        $region53: #{tpu_custom_call.1} parent=47 // pred_check
          %p413 = pneg %p412
        $region54: #{tpu_custom_call.1} parent=47 // pred_check_branch
          %415 = sbr.rel (%p413) target = $region56
        $region55: #{tpu_custom_call.1} parent=47 // pred_region
          %vm416 = vcmask 0
          %417 = vst.msk [vmem:[#allocation2] sm:$0x1] %vm416, -inf
          %418 = vst.msk [vmem:[#allocation3] sm:$0x1] %vm416, 0.0
          %419 = vst [vmem:[#allocation4] sm:$0x1] 0.0
        $region56: #{tpu_custom_call.1} parent=47 // pred_fallthru
          _
        %v420 = vld [vmem:[%s398] sm:$0xff]
        %v421 = vld [vmem:[%s398 + $0x8] sm:$0xff]
        %v422 = vld [vmem:[%s1] sm:$0xff]
        %v423 = vld [vmem:[%s1 + $0x8] sm:$0xff]
        %v424 = vld [vmem:[%s2] sm:$0x1]
        %v426 = vlaneseq
        %v427 = vshrl.u32 %v426, 7
        %v428 = vsub.s32 0, %v427
        %v429 = vrot.slane %v424, %v428
        %vm431 = vcmask 130048
        %v433 = vsel %vm431, %v420, 0
        %v436 = vsel %vm431, %v421, 0
        %438 = vmatprep.subr.mxu0 0.0
        %439 = vmatpush1.msra.mxu0 %v422
        %440 = vmatprep.subr.mxu0 0.0
        %441 = vmatpush1.msra.mxu0 %v423
        %442 = vmatprep.subr.mxu0 0.0
        %443 = vmatpush1.msra.mxu0 0.0
        %444 = vmatprep.subr.mxu0 0.0
        %445 = vmatpush1.msra.mxu0 0.0
        %446 = vmatprep.subr.mxu0 0.0
        %447 = vmatpush1.msra.mxu0 0.0
        %448 = vmatprep.subr.mxu0 0.0
        %449 = vmatpush1.msra.mxu0 0.0
        %450 = vmatprep.subr.mxu0 0.0
        %451 = vmatpush1.msra.mxu0 0.0
        %452 = vmatprep.subr.mxu0 0.0
        %453 = vmatpush1.msra.mxu0 0.0
        %454 = vmatprep.subr.mxu0 0.0
        %455 = vmatpush1.msra.mxu0 0.0
        %456 = vmatprep.subr.mxu0 0.0
        %457 = vmatpush1.msra.mxu0 0.0
        %458 = vmatprep.subr.mxu0 0.0
        %459 = vmatpush1.msra.mxu0 0.0
        %460 = vmatprep.subr.mxu0 0.0
        %461 = vmatpush1.msra.mxu0 0.0
        %462 = vmatprep.subr.mxu0 0.0
        %463 = vmatpush1.msra.mxu0 0.0
        %464 = vmatprep.subr.mxu0 0.0
        %465 = vmatpush1.msra.mxu0 0.0
        %466 = vmatprep.subr.mxu0 0.0
        %467 = vmatpush1.msra.mxu0 0.0
        %468 = vmatprep.subr.mxu0 0.0
        %469 = vmatpush1.msra.mxu0 0.0
        %470 = vmatprep.subr.mxu0 0.0
        %471 = vmatpush1.msra.mxu0 0.0
        %472 = vmatprep.subr.mxu0 0.0
        %473 = vmatpush1.msra.mxu0 0.0
        %474 = vmatprep.subr.mxu0 0.0
        %475 = vmatpush1.msra.mxu0 0.0
        %476 = vmatprep.subr.mxu0 0.0
        %477 = vmatpush1.msra.mxu0 0.0
        %478 = vmatprep.subr.mxu0 0.0
        %479 = vmatpush1.msra.mxu0 0.0
        %480 = vmatprep.subr.mxu0 0.0
        %481 = vmatpush1.msra.mxu0 0.0
        %482 = vmatprep.subr.mxu0 0.0
        %483 = vmatpush1.msra.mxu0 0.0
        %484 = vmatprep.subr.mxu0 0.0
        %485 = vmatpush1.msra.mxu0 0.0
        %486 = vmatprep.subr.mxu0 0.0
        %487 = vmatpush1.msra.mxu0 0.0
        %488 = vmatprep.subr.mxu0 0.0
        %489 = vmatpush1.msra.mxu0 0.0
        %490 = vmatprep.subr.mxu0 0.0
        %491 = vmatpush1.msra.mxu0 0.0
        %492 = vmatprep.subr.mxu0 0.0
        %493 = vmatpush1.msra.mxu0 0.0
        %494 = vmatprep.subr.mxu0 0.0
        %495 = vmatpush1.msra.mxu0 0.0
        %496 = vmatprep.subr.mxu0 0.0
        %497 = vmatpush1.msra.mxu0 0.0
        %498 = vmatprep.subr.mxu0 0.0
        %499 = vmatpush1.msra.mxu0 0.0
        %500 = vmatprep.subr.mxu0 0.0
        %501 = vmatpush1.msra.mxu0 0.0
        %502 = vmatprep.mubr.f32.mxu0 0.0
        %503 = vmatmul.mubr.f32.gmra.mrb[0].mxu0 %v433
        %v504 = vpop.f32.mrb[0].mxu0
        %v505 = vadd.f32 %v429, %v504
        %v506 = vpop.f32.mrb[0].mxu0
        %507 = vmatprep.mubr.f32.mxu0 0.0
        %508 = vmatmul.mubr.f32.gmra.mrb[0].mxu0 %v436
        %v509 = vpop.f32.mrb[0].mxu0
        %v510 = vadd.f32 %v429, %v509
        %v511 = vpop.f32.mrb[0].mxu0
        %512 = vdwg.mxu0
        %v513 = vmax.f32 %v505, 0.0
        %v514 = vmax.f32 %v510, 0.0
        %s515 = smul.u32 %s31, 2
        %s516 = sadd.s32 %s515, %s32
        %s517 = smul.u32 %s516, 16
        %v518 = vlaneseq
        %v519 = vshrl.u32 %v518, 7
        %v520 = vadd.s32 %v519, 8
        %v521 = vstv %s517
        %v522 = vadd.s32 %v521, %v519
        %v523 = vadd.s32 %v521, %v520
        %vm524 = vcmp.lt.s32.totalorder %v522, 50
        %vm525 = vcmp.lt.s32.totalorder %v523, 50
        %v526 = vsel %vm524, 1, 0
        %v527 = vsel %vm525, 1, 0
        %vm528 = vcmp.eq.s32.totalorder %v526, 1
        %vm529 = vcmp.eq.s32.totalorder %v527, 1
        %v530 = vsel %vm528, %v513, 0.0
        %v531 = vsel %vm529, %v514, 0.0
        %v532 = vld [vmem:[#allocation6] sm:$0xff]
        %v533 = vld [vmem:[#allocation6 + $0x8] sm:$0xff]
        %v534 = vld [vmem:[#allocation6 + $0x10] sm:$0xff]
        %v535 = vld [vmem:[#allocation6 + $0x18] sm:$0xff]
        %v536 = vld [vmem:[#allocation6 + $0x20] sm:$0xff]
        %v537 = vld [vmem:[#allocation6 + $0x28] sm:$0xff]
        %v538 = vld [vmem:[#allocation6 + $0x30] sm:$0xff]
        %v539 = vld [vmem:[#allocation6 + $0x38] sm:$0xff]
        %v540 = vld [vmem:[#allocation6 + $0x40] sm:$0xff]
        %v541 = vld [vmem:[#allocation6 + $0x48] sm:$0xff]
        %v542 = vld [vmem:[#allocation6 + $0x50] sm:$0xff]
        %v543 = vld [vmem:[#allocation6 + $0x58] sm:$0xff]
        %v544 = vld [vmem:[#allocation6 + $0x60] sm:$0xff]
        %v545 = vld [vmem:[#allocation6 + $0x68] sm:$0xff]
        %v546 = vld [vmem:[#allocation6 + $0x70] sm:$0xff]
        %v547 = vld [vmem:[#allocation6 + $0x78] sm:$0xff]
        %v548 = vld [vmem:[%s4] sm:$0x1]
        %v550 = vlaneseq
        %v551 = vshrl.u32 %v550, 7
        %v552 = vsub.s32 0, %v551
        %v553 = vrot.slane %v548, %v552
        %555 = vmatprep.subr.mxu0 0.0
        %556 = vmatpush1.msra.mxu0 %v532
        %557 = vmatprep.subr.mxu0 0.0
        %558 = vmatpush1.msra.mxu0 %v533
        %559 = vmatprep.subr.mxu0 0.0
        %560 = vmatpush1.msra.mxu0 %v534
        %561 = vmatprep.subr.mxu0 0.0
        %562 = vmatpush1.msra.mxu0 %v535
        %563 = vmatprep.subr.mxu0 0.0
        %564 = vmatpush1.msra.mxu0 %v536
        %565 = vmatprep.subr.mxu0 0.0
        %566 = vmatpush1.msra.mxu0 %v537
        %567 = vmatprep.subr.mxu0 0.0
        %568 = vmatpush1.msra.mxu0 %v538
        %569 = vmatprep.subr.mxu0 0.0
        %570 = vmatpush1.msra.mxu0 %v539
        %571 = vmatprep.subr.mxu0 0.0
        %572 = vmatpush1.msra.mxu0 %v540
        %573 = vmatprep.subr.mxu0 0.0
        %574 = vmatpush1.msra.mxu0 %v541
        %575 = vmatprep.subr.mxu0 0.0
        %576 = vmatpush1.msra.mxu0 %v542
        %577 = vmatprep.subr.mxu0 0.0
        %578 = vmatpush1.msra.mxu0 %v543
        %579 = vmatprep.subr.mxu0 0.0
        %580 = vmatpush1.msra.mxu0 %v544
        %581 = vmatprep.subr.mxu0 0.0
        %582 = vmatpush1.msra.mxu0 %v545
        %583 = vmatprep.subr.mxu0 0.0
        %584 = vmatpush1.msra.mxu0 %v546
        %585 = vmatprep.subr.mxu0 0.0
        %586 = vmatpush1.msra.mxu0 %v547
        %587 = vmatprep.subr.mxu0 0.0
        %588 = vmatpush1.msra.mxu0 0.0
        %589 = vmatprep.subr.mxu0 0.0
        %590 = vmatpush1.msra.mxu0 0.0
        %591 = vmatprep.subr.mxu0 0.0
        %592 = vmatpush1.msra.mxu0 0.0
        %593 = vmatprep.subr.mxu0 0.0
        %594 = vmatpush1.msra.mxu0 0.0
        %595 = vmatprep.subr.mxu0 0.0
        %596 = vmatpush1.msra.mxu0 0.0
        %597 = vmatprep.subr.mxu0 0.0
        %598 = vmatpush1.msra.mxu0 0.0
        %599 = vmatprep.subr.mxu0 0.0
        %600 = vmatpush1.msra.mxu0 0.0
        %601 = vmatprep.subr.mxu0 0.0
        %602 = vmatpush1.msra.mxu0 0.0
        %603 = vmatprep.subr.mxu0 0.0
        %604 = vmatpush1.msra.mxu0 0.0
        %605 = vmatprep.subr.mxu0 0.0
        %606 = vmatpush1.msra.mxu0 0.0
        %607 = vmatprep.subr.mxu0 0.0
        %608 = vmatpush1.msra.mxu0 0.0
        %609 = vmatprep.subr.mxu0 0.0
        %610 = vmatpush1.msra.mxu0 0.0
        %611 = vmatprep.subr.mxu0 0.0
        %612 = vmatpush1.msra.mxu0 0.0
        %613 = vmatprep.subr.mxu0 0.0
        %614 = vmatpush1.msra.mxu0 0.0
        %615 = vmatprep.subr.mxu0 0.0
        %616 = vmatpush1.msra.mxu0 0.0
        %617 = vmatprep.subr.mxu0 0.0
        %618 = vmatpush1.msra.mxu0 0.0
        %619 = vmatprep.mubr.f32.mxu0 0.0
        %620 = vmatmul.mubr.f32.gmra.mrb[0].mxu0 %v530
        %v621 = vpop.f32.mrb[0].mxu0
        %v622 = vadd.f32 %v553, %v621
        %v623 = vpop.f32.mrb[0].mxu0
        %624 = vmatprep.mubr.f32.mxu0 0.0
        %625 = vmatmul.mubr.f32.gmra.mrb[0].mxu0 %v531
        %v626 = vpop.f32.mrb[0].mxu0
        %v627 = vadd.f32 %v553, %v626
        %v628 = vpop.f32.mrb[0].mxu0
        %629 = vdwg.mxu0
        %v630 = vtanh.pop %v622
        %v631 = vtanh.pop %v627
        %v632 = vld [vmem:[%s5] sm:$0x1]
        %v634 = vlaneseq
        %v635 = vshrl.u32 %v634, 7
        %v636 = vsub.s32 0, %v635
        %v637 = vrot.slane %v632, %v636
        %v639 = vmul.f32 %v630, %v637
        %v640 = vmul.f32 %v631, %v637
        %641 = vadd.xlane.f32.xlu0 %v639
        %v642 = vpop.xlane.xlu0 %641
        %643 = vadd.xlane.f32.xlu0 %v640
        %v644 = vpop.xlane.xlu0 %643
        %v645 = vld [vmem:[#allocation5] sm:$0x1]
        %v647 = vlaneseq
        %v648 = vshrl.u32 %v647, 7
        %v649 = vsub.s32 0, %v648
        %v650 = vrot.slane %v645, %v649
        %v652 = vadd.f32 %v642, %v650
        %v653 = vadd.f32 %v644, %v650
        %v654 = vsel %vm524, %v652, -1e+30
        %v655 = vsel %vm525, %v653, -1e+30
        %v656 = vld [vmem:[#allocation2] sm:$0x1]
        %vm657 = vcmask 7168
        %v658 = vsel %vm657, %v654, -inf
        %v659 = vsel %vm657, %v655, -inf
        %v660 = vmax.f32 %v658, %v659
        %v661 = vrot.slane %v660, 4
        %v662 = vmax.f32 %v660, %v661
        %v663 = vrot.slane %v662, 2
        %v664 = vmax.f32 %v662, %v663
        %v665 = vrot.slane %v664, 1
        %v666 = vmax.f32 %v664, %v665
        %v667 = vmax.f32 %v656, %v666
        %v668 = vsub.f32 %v656, %v667
        %v669 = vmul.f32 %v668, 1.442695
        %v670 = vpow.pop %v669
        %v672 = vlaneseq
        %v673 = vshrl.u32 %v672, 7
        %v674 = vsub.s32 0, %v673
        %v675 = vrot.slane %v667, %v674
        %v677 = vsub.f32 %v654, %v675
        %v678 = vsub.f32 %v655, %v675
        %v679 = vmul.f32 %v677, 1.442695
        %v680 = vpow.pop %v679
        %v681 = vmul.f32 %v678, 1.442695
        %v682 = vpow.pop %v681
        %v683 = vsel %vm524, %v680, 0.0
        %v684 = vsel %vm525, %v682, 0.0
        %v685 = vld [vmem:[#allocation3] sm:$0x1]
        %v686 = vmul.f32 %v670, %v685
        %v687 = vsel %vm657, %v683, 0.0
        %v688 = vsel %vm657, %v684, 0.0
        %v689 = vadd.f32 %v687, %v688
        %v690 = vrot.slane %v689, 4
        %v691 = vadd.f32 %v689, %v690
        %v692 = vrot.slane %v691, 2
        %v693 = vadd.f32 %v691, %v692
        %v694 = vrot.slane %v693, 1
        %v695 = vadd.f32 %v693, %v694
        %v696 = vadd.f32 %v686, %v695
        %vm697 = vcmask 0
        %698 = vst.msk [vmem:[#allocation3] sm:$0x1] %vm697, %v696
        %v699 = vld [vmem:[#allocation4] sm:$0x1]
        %701 = vset.pattern.permute.xlu0 0
        %702 = vperm.xlu0 %701, %v670
        %v703 = vpop.permute.xlu0 %702
        %v705 = vlaneseq
        %v706 = vshrl.u32 %v705, 7
        %v707 = vsub.s32 0, %v706
        %v708 = vrot.slane %v703, %v707
        %v709 = vmul.f32 %v708, %v699
        %710 = vxpose.xlu0.b32.start [1/16] %v683, 128
        %711 = vxpose.xlu0.b32.cont [2/16] %v684, 128
        %712 = vxpose.xlu0.b32.cont [3/16] 0.0, 128
        %713 = vxpose.xlu0.b32.cont [4/16] 0.0, 128
        %714 = vxpose.xlu0.b32.cont [5/16] 0.0, 128
        %715 = vxpose.xlu0.b32.cont [6/16] 0.0, 128
        %716 = vxpose.xlu0.b32.cont [7/16] 0.0, 128
        %717 = vxpose.xlu0.b32.cont [8/16] 0.0, 128
        %718 = vxpose.xlu0.b32.cont [9/16] 0.0, 128
        %719 = vxpose.xlu0.b32.cont [10/16] 0.0, 128
        %720 = vxpose.xlu0.b32.cont [11/16] 0.0, 128
        %721 = vxpose.xlu0.b32.cont [12/16] 0.0, 128
        %722 = vxpose.xlu0.b32.cont [13/16] 0.0, 128
        %723 = vxpose.xlu0.b32.cont [14/16] 0.0, 128
        %724 = vxpose.xlu0.b32.cont [15/16] 0.0, 128
        %725 = vxpose.xlu0.b32.end [16/16] 0.0, 128
        %v726 = vpop.trf.xlu0
        %v727 = vpop.trf.xlu0
        %v728 = vpop.trf.xlu0
        %v729 = vpop.trf.xlu0
        %v730 = vpop.trf.xlu0
        %v731 = vpop.trf.xlu0
        %v732 = vpop.trf.xlu0
        %v733 = vpop.trf.xlu0
        %v734 = vpop.trf.xlu0
        %v735 = vpop.trf.xlu0
        %v736 = vpop.trf.xlu0
        %v737 = vpop.trf.xlu0
        %v738 = vpop.trf.xlu0
        %v739 = vpop.trf.xlu0
        %v740 = vpop.trf.xlu0
        %v741 = vpop.trf.xlu0
        %v743 = vsel %vm431, %v726, 0
        %745 = vmatprep.subr.mxu0 0.0
        %746 = vmatpush1.msra.mxu0 %v530
        %747 = vmatprep.subr.mxu0 0.0
        %748 = vmatpush1.msra.mxu0 %v531
        %749 = vmatprep.subr.mxu0 0.0
        %750 = vmatpush1.msra.mxu0 0.0
        %751 = vmatprep.subr.mxu0 0.0
        %752 = vmatpush1.msra.mxu0 0.0
        %753 = vmatprep.subr.mxu0 0.0
        %754 = vmatpush1.msra.mxu0 0.0
        %755 = vmatprep.subr.mxu0 0.0
        %756 = vmatpush1.msra.mxu0 0.0
        %757 = vmatprep.subr.mxu0 0.0
        %758 = vmatpush1.msra.mxu0 0.0
        %759 = vmatprep.subr.mxu0 0.0
        %760 = vmatpush1.msra.mxu0 0.0
        %761 = vmatprep.subr.mxu0 0.0
        %762 = vmatpush1.msra.mxu0 0.0
        %763 = vmatprep.subr.mxu0 0.0
        %764 = vmatpush1.msra.mxu0 0.0
        %765 = vmatprep.subr.mxu0 0.0
        %766 = vmatpush1.msra.mxu0 0.0
        %767 = vmatprep.subr.mxu0 0.0
        %768 = vmatpush1.msra.mxu0 0.0
        %769 = vmatprep.subr.mxu0 0.0
        %770 = vmatpush1.msra.mxu0 0.0
        %771 = vmatprep.subr.mxu0 0.0
        %772 = vmatpush1.msra.mxu0 0.0
        %773 = vmatprep.subr.mxu0 0.0
        %774 = vmatpush1.msra.mxu0 0.0
        %775 = vmatprep.subr.mxu0 0.0
        %776 = vmatpush1.msra.mxu0 0.0
        %777 = vmatprep.subr.mxu0 0.0
        %778 = vmatpush1.msra.mxu0 0.0
        %779 = vmatprep.subr.mxu0 0.0
        %780 = vmatpush1.msra.mxu0 0.0
        %781 = vmatprep.subr.mxu0 0.0
        %782 = vmatpush1.msra.mxu0 0.0
        %783 = vmatprep.subr.mxu0 0.0
        %784 = vmatpush1.msra.mxu0 0.0
        %785 = vmatprep.subr.mxu0 0.0
        %786 = vmatpush1.msra.mxu0 0.0
        %787 = vmatprep.subr.mxu0 0.0
        %788 = vmatpush1.msra.mxu0 0.0
        %789 = vmatprep.subr.mxu0 0.0
        %790 = vmatpush1.msra.mxu0 0.0
        %791 = vmatprep.subr.mxu0 0.0
        %792 = vmatpush1.msra.mxu0 0.0
        %793 = vmatprep.subr.mxu0 0.0
        %794 = vmatpush1.msra.mxu0 0.0
        %795 = vmatprep.subr.mxu0 0.0
        %796 = vmatpush1.msra.mxu0 0.0
        %797 = vmatprep.subr.mxu0 0.0
        %798 = vmatpush1.msra.mxu0 0.0
        %799 = vmatprep.subr.mxu0 0.0
        %800 = vmatpush1.msra.mxu0 0.0
        %801 = vmatprep.subr.mxu0 0.0
        %802 = vmatpush1.msra.mxu0 0.0
        %803 = vmatprep.subr.mxu0 0.0
        %804 = vmatpush1.msra.mxu0 0.0
        %805 = vmatprep.subr.mxu0 0.0
        %806 = vmatpush1.msra.mxu0 0.0
        %807 = vmatprep.subr.mxu0 0.0
        %808 = vmatpush1.msra.mxu0 0.0
        %809 = vmatprep.mubr.f32.mxu0 0.0
        %810 = vmatmul.mubr.f32.gmra.mrb[0].mxu0 %v743
        %v811 = vpop.f32.mrb[0].mxu0
        %v812 = vadd.f32 0.0, %v811
        %v813 = vpop.f32.mrb[0].mxu0
        %814 = vdwg.mxu0
        %v815 = vadd.f32 %v709, %v812
        %816 = vst [vmem:[#allocation4] sm:$0x1] %v815
        %817 = vst.msk [vmem:[#allocation2] sm:$0x1] %vm697, %v667
        %p818 = scmp.eq.s32.totalorder %s32, 1
        // Predicated region
        $region57: #{tpu_custom_call.1} parent=47 // pred_check
          %p819 = pneg %p818
        $region58: #{tpu_custom_call.1} parent=47 // pred_check_branch
          %821 = sbr.rel (%p819) target = $region60
        $region59: #{tpu_custom_call.1} parent=47 // pred_region
          %v822 = vld [vmem:[#allocation2] sm:$0x1]
          %823 = vst.msk [vmem:[%s408] sm:$0x1] %vm697, %v822
          %v824 = vld [vmem:[#allocation3] sm:$0x1]
          %825 = vst.msk [vmem:[%s411] sm:$0x1] %vm697, %v824
          %v826 = vld [vmem:[#allocation4] sm:$0x1]
          %827 = vst [vmem:[%s387] sm:$0x1] %v826
        $region60: #{tpu_custom_call.1} parent=47 // pred_fallthru
          _
        %p828 = scmp.lt.s32.totalorder %s31, 1
        %s829 = scalar_select %p828, %s31, 1
        %s830 = scalar_lea.vmem %s7, %s829
        %p831 = scmp.lt.s32.totalorder %s31, 1
        %s832 = scalar_select %p831, %s31, 1
        %s833 = scalar_lea.vmem %s8, %s832
        %s834 = sand.u32 %s255, 1
        %s835 = scalar_lea.sflag [#allocation8], %s834
        %s836 = sand.u32 %s255, 1
        %s837 = scalar_lea.vmem [#allocation9], %s836
        // Predicated region
        $region61: #{tpu_custom_call.1} parent=47 // pred_check
          %p838 = pneg %p213
        $region62: #{tpu_custom_call.1} parent=47 // pred_check_branch
          %840 = sbr.rel (%p838) target = $region64
        $region63: #{tpu_custom_call.1} parent=47 // pred_region
          _
        $region64: #{tpu_custom_call.1} parent=47 // pred_fallthru
          _
        // Predicated region
        $region65: #{tpu_custom_call.1} parent=47 // pred_check
          %p841 = pneg %p239
        $region66: #{tpu_custom_call.1} parent=47 // pred_check_branch
          %843 = sbr.rel (%p841) target = $region68
        $region67: #{tpu_custom_call.1} parent=47 // pred_region
          _
        $region68: #{tpu_custom_call.1} parent=47 // pred_fallthru
          _
        // Predicated region
        $region69: #{tpu_custom_call.1} parent=47 // pred_check
          %p844 = pneg %p265
        $region70: #{tpu_custom_call.1} parent=47 // pred_check_branch
          %846 = sbr.rel (%p844) target = $region72
        $region71: #{tpu_custom_call.1} parent=47 // pred_region
          %s848 = ssub.s32 16, 16
          %849 = vsyncadd %s835, %s848
          %s850 = smul.addr %s31, 16
          %s851 = scalar_lea.hbm %s9, %s850
          %s853 = sshll.u32 %s837, 4
          %s854 = int_to_ptr.vmem [resolvable:$true] %s853
          %856 = dma.vmem_to_hbm [thread:$0]  %s854, 16, %s851, %s835
        $region72: #{tpu_custom_call.1} parent=47 // pred_fallthru
          _
      $region48: #{tpu_custom_call.1} parent=5 // pred_fallthru
        _
      %p857 = scmp.le.s32.totalorder 2, %s22
      // Predicated region
      $region73: #{tpu_custom_call.1} parent=5 // pred_check
        %p858 = pneg %p857
      $region74: #{tpu_custom_call.1} parent=5 // pred_check_branch
        %860 = sbr.rel (%p858) target = $region76
      $region75: #{tpu_custom_call.1} parent=5 // pred_region
        %s861 = ssub.s32 %s22, 2
        // Predicated region
        $region77: #{tpu_custom_call.1} parent=75 // pred_check
          %p862 = pneg %p219
        $region78: #{tpu_custom_call.1} parent=75 // pred_check_branch
          %864 = sbr.rel (%p862) target = $region80
        $region79: #{tpu_custom_call.1} parent=75 // pred_region
          %p865 = scmp.lt.s32.totalorder %s33, 1
          %s866 = scalar_select %p865, %s33, 1
          %s867 = scalar_lea.vmem %s7, %s866
        $region80: #{tpu_custom_call.1} parent=75 // pred_fallthru
          _
        // Predicated region
        $region81: #{tpu_custom_call.1} parent=75 // pred_check
          %p868 = pneg %p245
        $region82: #{tpu_custom_call.1} parent=75 // pred_check_branch
          %870 = sbr.rel (%p868) target = $region84
        $region83: #{tpu_custom_call.1} parent=75 // pred_region
          %p871 = scmp.lt.s32.totalorder %s33, 1
          %s872 = scalar_select %p871, %s33, 1
          %s873 = scalar_lea.vmem %s8, %s872
        $region84: #{tpu_custom_call.1} parent=75 // pred_fallthru
          _
        // Predicated region
        $region85: #{tpu_custom_call.1} parent=75 // pred_check
          %p874 = pneg %p271
        $region86: #{tpu_custom_call.1} parent=75 // pred_check_branch
          %876 = sbr.rel (%p874) target = $region88
        $region87: #{tpu_custom_call.1} parent=75 // pred_region
          %s877 = sand.u32 %s256, 1
          %s878 = scalar_lea.sflag [#allocation8], %s877
          %s879 = sand.u32 %s256, 1
          %s880 = scalar_lea.vmem [#allocation9], %s879
          %881 = dma.done %s878, 16
        $region88: #{tpu_custom_call.1} parent=75 // pred_fallthru
          _
      $region76: #{tpu_custom_call.1} parent=5 // pred_fallthru
        _
    $region6: #{tpu_custom_call.1} parent=1 // loop_footer
      %s26 = sadd.s32 1, %s22
    $region7: #{tpu_custom_call.1} parent=1 // loop_footer_branch
      %21 = sbr.rel target = $region3
    $region8: #{tpu_custom_call.1} parent=1 // loop_exit
      _
    %882 = vsyncpa [#allocation7], 1
    %s883 = scalar_lea.sflag [#allocation7], 1
    %884 = vsyncpa %s883, 1
    %885 = vsyncpa [#allocation8], 1
    %s886 = scalar_lea.sflag [#allocation8], 1
    %887 = vsyncpa %s886, 1

</llo_original>
